<compile_context>
chip_gen: v5e
topology: v5e:2x2
jax: 0.10.0
libtpu: 0.0.40
codegen_flags: <defaults>
</compile_context>

<pallas_src>
import functools

import jax
import jax.numpy as jnp
from jax import lax
from jax.experimental import pallas as pl
from jax.experimental.pallas import tpu as pltpu


def _answer_encoder_kernel(ids_ref, emb_ref, w_ref, b_ref, o_ref, *, seq_len):
    """Fused embedding-gather (one-hot MXU matmul) -> mean over seq -> Linear -> tanh."""
    ids = ids_ref[...]                                   # (TB, L) int32 token ids
    tb = ids.shape[0]
    vocab = emb_ref.shape[0]

    # Clamp ids (jnp.take semantics); with the one-hot path an OOB id can never read OOB,
    # but clamping keeps the result identical to a clamped gather.
    ids = jnp.clip(ids, 0, vocab - 1)

    inv_l = 1.0 / float(seq_len)                         # fold the 1/L mean scale in here
    iota_v = lax.broadcasted_iota(jnp.int32, (tb, vocab), 1)   # lane iota over vocab

    # counts[b, v] = (#{l : ids[b, l] == v}) / L.  Static L loop keeps live intermediates
    # at a single (TB, V) tile instead of a (TB, L, V) 3-D one-hot.
    counts = jnp.zeros((tb, vocab), jnp.float32)
    for l in range(seq_len):
        counts = counts + jnp.where(ids[:, l:l + 1] == iota_v, inv_l, 0.0)

    # Mean-pooled embeddings: (TB, V) @ (V, E) on the MXU (gather + mean fused).
    pooled = jnp.dot(counts, emb_ref[...], preferred_element_type=jnp.float32)   # (TB, E)

    # Linear(E, 1024) + bias + tanh.  Output lane dim H=1024 is lane-dense.
    y = jnp.dot(pooled, w_ref[...], preferred_element_type=jnp.float32)          # (TB, H)
    o_ref[...] = jnp.tanh(y + b_ref[...])


def prepare_params(emb_table, fc_w, fc_b):
    """One-time parameter prep (hoisted out of the per-call wrapper)."""
    emb = jnp.asarray(emb_table, jnp.float32)            # (V, E)
    w_t = jnp.asarray(fc_w, jnp.float32).T               # torch (out, in) -> (E, H)
    b2d = jnp.asarray(fc_b, jnp.float32).reshape(1, -1)  # (1, H)
    return emb, w_t, b2d


@functools.partial(jax.jit, static_argnames=("block_b",))
def answer_encoder_forward(token_ids, emb_table, fc_w_t, fc_b2d, *, block_b=128):
    """token_ids: (B, L) int; emb_table: (V, E) f32; fc_w_t: (E, H) f32; fc_b2d: (1, H) f32."""
    B, L = token_ids.shape
    V, E = emb_table.shape
    H = fc_w_t.shape[1]

    # Batch tiling: one grid step per TB rows; params stay VMEM-resident across steps.
    TB = min(block_b, B)
    n_blocks = pl.cdiv(B, TB)
    Bp = n_blocks * TB
    ids = token_ids.astype(jnp.int32)
    if Bp != B:
        ids = jnp.pad(ids, ((0, Bp - B), (0, 0)))        # padded rows sliced off below

    kernel = functools.partial(_answer_encoder_kernel, seq_len=L)

    out = pl.pallas_call(
        kernel,
        out_shape=jax.ShapeDtypeStruct((Bp, H), jnp.float32),
        grid_spec=pltpu.PrefetchScalarGridSpec(
            num_scalar_prefetch=0,
            grid=(n_blocks,),
            in_specs=[
                pl.BlockSpec((TB, L), lambda i: (i, 0)),   # token ids, tiled over batch
                pl.BlockSpec((V, E), lambda i: (0, 0)),    # embedding table (resident)
                pl.BlockSpec((E, H), lambda i: (0, 0)),    # fc weight, transposed (resident)
                pl.BlockSpec((1, H), lambda i: (0, 0)),    # fc bias (resident)
            ],
            out_specs=pl.BlockSpec((TB, H), lambda i: (i, 0)),
        ),
        compiler_params=pltpu.CompilerParams(
            dimension_semantics=("parallel",),             # megacore-shard batch on v7x
            vmem_limit_bytes=32 * 1024 * 1024,             # explicit; well under v7x 64 MiB
        ),
    )(ids, emb_table, fc_w_t, fc_b2d)

    return out[:B]


if __name__ == "__main__":
    # Module hyperparameters (small, consistent with the PyTorch forward).
    answer_vocab_size = 50      # answer_vocal_size (V)
    word_embedding_size = 32    # E
    hidden_size = 64            # ctor arg, unused by the forward (fc always maps E -> 1024)
    fc_out = 1024               # nn.Linear(word_embedding_size, 1024) -> H

    batch = 2
    seq = 8

    key = jax.random.PRNGKey(0)
    k_tok, k_emb, k_w, k_b = jax.random.split(key, 4)

    emb_table = jax.random.normal(
        k_emb, (answer_vocab_size, word_embedding_size), dtype=jnp.float32) * 0.1
    fc_w = jax.random.normal(
        k_w, (fc_out, word_embedding_size), dtype=jnp.float32) * 0.05     # torch (out, in)
    fc_b = jax.random.normal(k_b, (fc_out,), dtype=jnp.float32) * 0.05
    token_ids = jax.random.randint(
        k_tok, (batch, seq), 0, answer_vocab_size, dtype=jnp.int32)

    # One-time parameter prep (casts / transpose / bias reshape hoisted out of the hot path).
    emb_p, fc_w_t, fc_b2d = prepare_params(emb_table, fc_w, fc_b)

    out = answer_encoder_forward(token_ids, emb_p, fc_w_t, fc_b2d)
    out = jax.block_until_ready(out)

    # Pure-JAX reference with the same semantics as the PyTorch forward.
    gathered = jnp.take(emb_table, token_ids, axis=0)                      # (B, L, E)
    pooled_ref = jnp.mean(gathered, axis=1)                                # (B, E)
    ref = jnp.tanh(
        jnp.dot(pooled_ref, fc_w.T, precision=jax.lax.Precision.HIGHEST) + fc_b[None, :])

    assert out.shape == (batch, fc_out), out.shape
    assert jnp.allclose(out, ref, atol=1e-4, rtol=1e-4), float(jnp.max(jnp.abs(out - ref)))

    print("KERNEL_OK")
</pallas_src>

<mosaic_0001>
module attributes {stable_mosaic.version = 11 : i64} {
  func.func @_answer_encoder_kernel(%arg0: i32, %arg1: memref<2x8xi32, #tpu.memory_space<vmem>>, %arg2: memref<50x32xf32, #tpu.memory_space<vmem>>, %arg3: memref<32x1024xf32, #tpu.memory_space<vmem>>, %arg4: memref<1x1024xf32, #tpu.memory_space<vmem>>, %arg5: memref<2x1024xf32, #tpu.memory_space<vmem>>) attributes {dimension_semantics = [#tpu.dimension_semantics<parallel>], iteration_bounds = array<i64: 1>, scalar_prefetch = 0 : i64, scratch_operands = 0 : i64, tpu.core_type = #tpu.core_type<tc>, window_params = [{transform_indices = @transform_0, window_bounds = array<i64: 2, 8>}, {pipeline_mode = #tpu.pipeline_mode<synchronous>, transform_indices = @transform_1, window_bounds = array<i64: 50, 32>}, {pipeline_mode = #tpu.pipeline_mode<synchronous>, transform_indices = @transform_2, window_bounds = array<i64: 32, 1024>}, {pipeline_mode = #tpu.pipeline_mode<synchronous>, transform_indices = @transform_3, window_bounds = array<i64: 1, 1024>}, {transform_indices = @transform_4, window_bounds = array<i64: 2, 1024>}]} {
    %c0 = arith.constant 0 : index
    %c0_0 = arith.constant 0 : index
    %0 = vector.load %arg1[%c0, %c0_0] : memref<2x8xi32, #tpu.memory_space<vmem>>, vector<2x8xi32>
    %c0_i32 = arith.constant 0 : i32
    %c49_i32 = arith.constant 49 : i32
    %1 = vector.broadcast %c0_i32 : i32 to vector<2x8xi32>
    %2 = arith.maxsi %1, %0 : vector<2x8xi32>
    %3 = vector.broadcast %c49_i32 : i32 to vector<2x8xi32>
    %4 = arith.minsi %3, %2 : vector<2x8xi32>
    %5 = tpu.iota {dimensions = array<i32: 1>} : vector<2x50xi32>
    %cst = arith.constant 0.000000e+00 : f32
    %6 = vector.broadcast %cst : f32 to vector<2x50xf32>
    %7 = vector.extract_strided_slice %4 {offsets = [0, 0], sizes = [2, 1], strides = [1, 1]} : vector<2x8xi32> to vector<2x1xi32>
    %8 = vector.broadcast %7 : vector<2x1xi32> to vector<2x50xi32>
    %9 = arith.cmpi eq, %8, %5 : vector<2x50xi32>
    %cst_1 = arith.constant 1.250000e-01 : f32
    %cst_2 = arith.constant 0.000000e+00 : f32
    %10 = vector.broadcast %cst_1 : f32 to vector<2x50xf32>
    %11 = vector.broadcast %cst_2 : f32 to vector<2x50xf32>
    %12 = arith.select %9, %10, %11 : vector<2x50xi1>, vector<2x50xf32>
    %13 = arith.addf %6, %12 : vector<2x50xf32>
    %14 = vector.extract_strided_slice %4 {offsets = [0, 1], sizes = [2, 1], strides = [1, 1]} : vector<2x8xi32> to vector<2x1xi32>
    %15 = vector.broadcast %14 : vector<2x1xi32> to vector<2x50xi32>
    %16 = arith.cmpi eq, %15, %5 : vector<2x50xi32>
    %cst_3 = arith.constant 1.250000e-01 : f32
    %cst_4 = arith.constant 0.000000e+00 : f32
    %17 = vector.broadcast %cst_3 : f32 to vector<2x50xf32>
    %18 = vector.broadcast %cst_4 : f32 to vector<2x50xf32>
    %19 = arith.select %16, %17, %18 : vector<2x50xi1>, vector<2x50xf32>
    %20 = arith.addf %13, %19 : vector<2x50xf32>
    %21 = vector.extract_strided_slice %4 {offsets = [0, 2], sizes = [2, 1], strides = [1, 1]} : vector<2x8xi32> to vector<2x1xi32>
    %22 = vector.broadcast %21 : vector<2x1xi32> to vector<2x50xi32>
    %23 = arith.cmpi eq, %22, %5 : vector<2x50xi32>
    %cst_5 = arith.constant 1.250000e-01 : f32
    %cst_6 = arith.constant 0.000000e+00 : f32
    %24 = vector.broadcast %cst_5 : f32 to vector<2x50xf32>
    %25 = vector.broadcast %cst_6 : f32 to vector<2x50xf32>
    %26 = arith.select %23, %24, %25 : vector<2x50xi1>, vector<2x50xf32>
    %27 = arith.addf %20, %26 : vector<2x50xf32>
    %28 = vector.extract_strided_slice %4 {offsets = [0, 3], sizes = [2, 1], strides = [1, 1]} : vector<2x8xi32> to vector<2x1xi32>
    %29 = vector.broadcast %28 : vector<2x1xi32> to vector<2x50xi32>
    %30 = arith.cmpi eq, %29, %5 : vector<2x50xi32>
    %cst_7 = arith.constant 1.250000e-01 : f32
    %cst_8 = arith.constant 0.000000e+00 : f32
    %31 = vector.broadcast %cst_7 : f32 to vector<2x50xf32>
    %32 = vector.broadcast %cst_8 : f32 to vector<2x50xf32>
    %33 = arith.select %30, %31, %32 : vector<2x50xi1>, vector<2x50xf32>
    %34 = arith.addf %27, %33 : vector<2x50xf32>
    %35 = vector.extract_strided_slice %4 {offsets = [0, 4], sizes = [2, 1], strides = [1, 1]} : vector<2x8xi32> to vector<2x1xi32>
    %36 = vector.broadcast %35 : vector<2x1xi32> to vector<2x50xi32>
    %37 = arith.cmpi eq, %36, %5 : vector<2x50xi32>
    %cst_9 = arith.constant 1.250000e-01 : f32
    %cst_10 = arith.constant 0.000000e+00 : f32
    %38 = vector.broadcast %cst_9 : f32 to vector<2x50xf32>
    %39 = vector.broadcast %cst_10 : f32 to vector<2x50xf32>
    %40 = arith.select %37, %38, %39 : vector<2x50xi1>, vector<2x50xf32>
    %41 = arith.addf %34, %40 : vector<2x50xf32>
    %42 = vector.extract_strided_slice %4 {offsets = [0, 5], sizes = [2, 1], strides = [1, 1]} : vector<2x8xi32> to vector<2x1xi32>
    %43 = vector.broadcast %42 : vector<2x1xi32> to vector<2x50xi32>
    %44 = arith.cmpi eq, %43, %5 : vector<2x50xi32>
    %cst_11 = arith.constant 1.250000e-01 : f32
    %cst_12 = arith.constant 0.000000e+00 : f32
    %45 = vector.broadcast %cst_11 : f32 to vector<2x50xf32>
    %46 = vector.broadcast %cst_12 : f32 to vector<2x50xf32>
    %47 = arith.select %44, %45, %46 : vector<2x50xi1>, vector<2x50xf32>
    %48 = arith.addf %41, %47 : vector<2x50xf32>
    %49 = vector.extract_strided_slice %4 {offsets = [0, 6], sizes = [2, 1], strides = [1, 1]} : vector<2x8xi32> to vector<2x1xi32>
    %50 = vector.broadcast %49 : vector<2x1xi32> to vector<2x50xi32>
    %51 = arith.cmpi eq, %50, %5 : vector<2x50xi32>
    %cst_13 = arith.constant 1.250000e-01 : f32
    %cst_14 = arith.constant 0.000000e+00 : f32
    %52 = vector.broadcast %cst_13 : f32 to vector<2x50xf32>
    %53 = vector.broadcast %cst_14 : f32 to vector<2x50xf32>
    %54 = arith.select %51, %52, %53 : vector<2x50xi1>, vector<2x50xf32>
    %55 = arith.addf %48, %54 : vector<2x50xf32>
    %56 = vector.extract_strided_slice %4 {offsets = [0, 7], sizes = [2, 1], strides = [1, 1]} : vector<2x8xi32> to vector<2x1xi32>
    %57 = vector.broadcast %56 : vector<2x1xi32> to vector<2x50xi32>
    %58 = arith.cmpi eq, %57, %5 : vector<2x50xi32>
    %cst_15 = arith.constant 1.250000e-01 : f32
    %cst_16 = arith.constant 0.000000e+00 : f32
    %59 = vector.broadcast %cst_15 : f32 to vector<2x50xf32>
    %60 = vector.broadcast %cst_16 : f32 to vector<2x50xf32>
    %61 = arith.select %58, %59, %60 : vector<2x50xi1>, vector<2x50xf32>
    %62 = arith.addf %55, %61 : vector<2x50xf32>
    %c0_17 = arith.constant 0 : index
    %c0_18 = arith.constant 0 : index
    %63 = vector.load %arg2[%c0_17, %c0_18] : memref<50x32xf32, #tpu.memory_space<vmem>>, vector<50x32xf32>
    %cst_19 = arith.constant dense<0.000000e+00> : vector<2x32xf32>
    %64 = tpu.matmul %62, %63, %cst_19 {dimension_numbers = #tpu.dot_dimension_numbers<[1], [0], [0], [1], [0, 0, 1, 1], [], []>} : vector<2x50xf32>, vector<50x32xf32>, vector<2x32xf32> -> vector<2x32xf32>
    %c0_20 = arith.constant 0 : index
    %c0_21 = arith.constant 0 : index
    %65 = vector.load %arg3[%c0_20, %c0_21] : memref<32x1024xf32, #tpu.memory_space<vmem>>, vector<32x1024xf32>
    %cst_22 = arith.constant dense<0.000000e+00> : vector<2x1024xf32>
    %66 = tpu.matmul %64, %65, %cst_22 {dimension_numbers = #tpu.dot_dimension_numbers<[1], [0], [0], [1], [0, 0, 1, 1], [], []>} : vector<2x32xf32>, vector<32x1024xf32>, vector<2x1024xf32> -> vector<2x1024xf32>
    %c0_23 = arith.constant 0 : index
    %c0_24 = arith.constant 0 : index
    %67 = vector.load %arg4[%c0_23, %c0_24] : memref<1x1024xf32, #tpu.memory_space<vmem>>, vector<1x1024xf32>
    %68 = vector.broadcast %67 : vector<1x1024xf32> to vector<2x1024xf32>
    %69 = arith.addf %66, %68 : vector<2x1024xf32>
    %70 = math.tanh %69 : vector<2x1024xf32>
    %c0_25 = arith.constant 0 : index
    %c0_26 = arith.constant 0 : index
    %71 = vector.load %arg5[%c0_25, %c0_26] : memref<2x1024xf32, #tpu.memory_space<vmem>>, vector<2x1024xf32>
    tpu.vector_store %arg5[%c0_25, %c0_26], %70 {strides = array<i32>} : memref<2x1024xf32, #tpu.memory_space<vmem>>, vector<2x1024xf32>,
    return
  }
  func.func @transform_0(%arg0: i32) -> (i32, i32) {
    %c0_i32 = arith.constant 0 : i32
    %c0_i32_0 = arith.constant 0 : i32
    return %arg0, %c0_i32 : i32, i32
  }
  func.func @transform_1(%arg0: i32) -> (i32, i32) {
    %c0_i32 = arith.constant 0 : i32
    %c0_i32_0 = arith.constant 0 : i32
    %c0_i32_1 = arith.constant 0 : i32
    return %c0_i32, %c0_i32_0 : i32, i32
  }
  func.func @transform_2(%arg0: i32) -> (i32, i32) {
    %c0_i32 = arith.constant 0 : i32
    %c0_i32_0 = arith.constant 0 : i32
    %c0_i32_1 = arith.constant 0 : i32
    return %c0_i32, %c0_i32_0 : i32, i32
  }
  func.func @transform_3(%arg0: i32) -> (i32, i32) {
    %c0_i32 = arith.constant 0 : i32
    %c0_i32_0 = arith.constant 0 : i32
    %c0_i32_1 = arith.constant 0 : i32
    return %c0_i32, %c0_i32_0 : i32, i32
  }
  func.func @transform_4(%arg0: i32) -> (i32, i32) {
    %c0_i32 = arith.constant 0 : i32
    %c0_i32_0 = arith.constant 0 : i32
    return %arg0, %c0_i32 : i32, i32
  }
}

</mosaic_0001>

<llo_original>
// kernel: answer_encoder_forward.1
$region0: #{answer_encoder_forward.1}
  #allocation0 [shape = 'u32[]', space=smem, size = 0x4, offset = 0x4, fixed_abs, tag = 'smem constant byte address 0x4 - core index']
  #allocation1 [shape = 'u32[72,128]{1,0:T(1,128)}', space=vmem, size = 0x9000, scoped, tag = 'internal scratch']
  %s0 = inlined_call_operand.vmem [shape: s32[2,8], index: 0, kind: input, shape index: {}]
  %s1 = inlined_call_operand.vmem [shape: f32[50,32], index: 1, kind: input, shape index: {}]
  %s2 = inlined_call_operand.hbm [shape: f32[32,1024], index: 2, kind: input, shape index: {}]
  %s3 = inlined_call_operand.vmem [shape: f32[1,1024], index: 3, kind: input, shape index: {}]
  %s4 = inlined_call_operand.hbm [shape: f32[2,1024], index: 4, kind: output, shape index: {}]
  %s5 = sld [smem:[#allocation0]]
  $region30: #{answer_encoder_forward.1} parent=0
    _
  %s7 = ssub.s32 1, %s5
  %s8 = scalar_select 0, %s7, %s5
  $region1: #{answer_encoder_forward.1} parent=0
    #allocation2 [shape = 'u8[131072]{0}', space=vmem, size = 0x20000, scoped, tag = 'input window, operand 2, single buffered']
    #allocation3 [shape = 's32[1]{0}', space=sflag, size = 0x4, scoped, tag = 'scoped memory for answer_encoder_forward.1']
    #allocation4 [shape = 's32[1]{0}', space=sflag, size = 0x4, scoped, tag = 'scoped memory for answer_encoder_forward.1']
    #allocation5 [shape = 'u8[8192]{0}', space=vmem, size = 0x2000, scoped, tag = 'output window, operand 0, single buffered']
    %9 = vsyncpa [#allocation3], 0
    %10 = vsyncpa [#allocation4], 0
    // Predicated region
    $region2: #{answer_encoder_forward.1} parent=1 // pred_check
      _
    $region3: #{answer_encoder_forward.1} parent=1 // pred_check_branch
      %12 = sbr.rel (0) target = $region5
    $region4: #{answer_encoder_forward.1} parent=1 // pred_region
      _
    $region5: #{answer_encoder_forward.1} parent=1 // pred_fallthru
      _
    // Predicated region
    $region6: #{answer_encoder_forward.1} parent=1 // pred_check
      _
    $region7: #{answer_encoder_forward.1} parent=1 // pred_check_branch
      %14 = sbr.rel (0) target = $region9
    $region8: #{answer_encoder_forward.1} parent=1 // pred_region
      _
    $region9: #{answer_encoder_forward.1} parent=1 // pred_fallthru
      _
    // Predicated region
    $region10: #{answer_encoder_forward.1} parent=1 // pred_check
      _
    $region11: #{answer_encoder_forward.1} parent=1 // pred_check_branch
      %16 = sbr.rel (0) target = $region13
    $region12: #{answer_encoder_forward.1} parent=1 // pred_region
      %18 = vsyncadd [#allocation3], 0
      %s19 = sshll.u32 %s2, 4
      %s20 = int_to_ptr.hbm [resolvable:$true] %s19
      %s21 = sshll.u32 [#allocation2], 4
      %s22 = int_to_ptr.vmem [resolvable:$true] %s21
      %27 = dma.hbm_to_vmem [thread:$0]  %s20, 4096, %s22, [#allocation3], 1024, 1024, 64
    $region13: #{answer_encoder_forward.1} parent=1 // pred_fallthru
      _
    // Predicated region
    $region14: #{answer_encoder_forward.1} parent=1 // pred_check
      _
    $region15: #{answer_encoder_forward.1} parent=1 // pred_check_branch
      %29 = sbr.rel (0) target = $region17
    $region16: #{answer_encoder_forward.1} parent=1 // pred_region
      _
    $region17: #{answer_encoder_forward.1} parent=1 // pred_fallthru
      _
    // Predicated region
    $region18: #{answer_encoder_forward.1} parent=1 // pred_check
      _
    $region19: #{answer_encoder_forward.1} parent=1 // pred_check_branch
      %31 = sbr.rel (0) target = $region21
    $region20: #{answer_encoder_forward.1} parent=1 // pred_region
      %33 = dma.done [#allocation3], 4096
    $region21: #{answer_encoder_forward.1} parent=1 // pred_fallthru
      _
    %v34 = vld [vmem:[%s0] sm:$0x3]
    %vm35 = vcmp.gt.s32.totalorder %v34, 0
    %v36 = vsel %vm35, %v34, 0
    %vm37 = vcmp.lt.s32.totalorder %v36, 49
    %v38 = vsel %vm37, %v36, 49
    %v39 = vlaneseq
    %v40 = vand.u32 %v39, 127
    %41 = vset.pattern.permute.xlu0 0
    %42 = vperm.xlu0 %41, %v38
    %v43 = vpop.permute.xlu0 %42
    %vm44 = vcmp.eq.s32.totalorder %v43, %v40
    %v45 = vsel %vm44, 0.125, 0.0
    %v46 = vadd.f32 %v45, 0.0
    %47 = vset.pattern.permute.xlu0 1
    %48 = vperm.xlu0 %47, %v38
    %v49 = vpop.permute.xlu0 %48
    %vm50 = vcmp.eq.s32.totalorder %v49, %v40
    %v51 = vsel %vm50, 0.125, 0.0
    %v52 = vadd.f32 %v46, %v51
    %53 = vset.pattern.permute.xlu0 2
    %54 = vperm.xlu0 %53, %v38
    %v55 = vpop.permute.xlu0 %54
    %vm56 = vcmp.eq.s32.totalorder %v55, %v40
    %v57 = vsel %vm56, 0.125, 0.0
    %v58 = vadd.f32 %v52, %v57
    %59 = vset.pattern.permute.xlu0 3
    %60 = vperm.xlu0 %59, %v38
    %v61 = vpop.permute.xlu0 %60
    %vm62 = vcmp.eq.s32.totalorder %v61, %v40
    %v63 = vsel %vm62, 0.125, 0.0
    %v64 = vadd.f32 %v58, %v63
    %65 = vset.pattern.permute.xlu0 4
    %66 = vperm.xlu0 %65, %v38
    %v67 = vpop.permute.xlu0 %66
    %vm68 = vcmp.eq.s32.totalorder %v67, %v40
    %v69 = vsel %vm68, 0.125, 0.0
    %v70 = vadd.f32 %v64, %v69
    %71 = vset.pattern.permute.xlu0 5
    %72 = vperm.xlu0 %71, %v38
    %v73 = vpop.permute.xlu0 %72
    %vm74 = vcmp.eq.s32.totalorder %v73, %v40
    %v75 = vsel %vm74, 0.125, 0.0
    %v76 = vadd.f32 %v70, %v75
    %77 = vset.pattern.permute.xlu0 6
    %78 = vperm.xlu0 %77, %v38
    %v79 = vpop.permute.xlu0 %78
    %vm80 = vcmp.eq.s32.totalorder %v79, %v40
    %v81 = vsel %vm80, 0.125, 0.0
    %v82 = vadd.f32 %v76, %v81
    %83 = vset.pattern.permute.xlu0 7
    %84 = vperm.xlu0 %83, %v38
    %v85 = vpop.permute.xlu0 %84
    %vm86 = vcmp.eq.s32.totalorder %v85, %v40
    %v87 = vsel %vm86, 0.125, 0.0
    %v88 = vadd.f32 %v82, %v87
    %v89 = vld [vmem:[%s1] sm:$0xff]
    %v90 = vld [vmem:[%s1 + $0x8] sm:$0xff]
    %v91 = vld [vmem:[%s1 + $0x10] sm:$0xff]
    %v92 = vld [vmem:[%s1 + $0x18] sm:$0xff]
    %v93 = vld [vmem:[%s1 + $0x20] sm:$0xff]
    %v94 = vld [vmem:[%s1 + $0x28] sm:$0xff]
    %v95 = vld [vmem:[%s1 + $0x30] sm:$0x3]
    %vm96 = vcmask 408576
    %v98 = vsel %vm96, %v88, 0
    %vm100 = vcmask 1041408
    %v102 = vsel %vm100, %v95, 0
    %104 = vmatpush.msra.mxu0 0.0
    %105 = vmatpush.msra.mxu0 0.0
    %106 = vmatpush.msra.mxu0 0.0
    %107 = vmatpush.msra.mxu0 0.0
    %108 = vmatpush.msra.mxu0 0.0
    %109 = vmatpush.msra.mxu0 0.0
    %110 = vmatpush.msra.mxu0 0.0
    %111 = vmatpush.msra.mxu0 0.0
    %112 = vmatpush.msra.mxu0 0.0
    %113 = vmatpush.msra.mxu0 %v102
    %114 = vmatpush.msra.mxu0 %v94
    %115 = vmatpush.msra.mxu0 %v93
    %116 = vmatpush.msra.mxu0 %v92
    %117 = vmatpush.msra.mxu0 %v91
    %118 = vmatpush.msra.mxu0 %v90
    %119 = vmatpush.msra.mxu0 %v89
    %120 = vmatmul.f32.gmra.mxu0 %v98
    %v121 = vpop.f32.mrf.mxu0
    %v122 = vadd.f32 0.0, %v121
    %123 = vdwg.mxu0
    %v124 = vld [vmem:[#allocation2] sm:$0xff]
    %v125 = vld [vmem:[#allocation2 + $0x8] sm:$0xff]
    %v126 = vld [vmem:[#allocation2 + $0x10] sm:$0xff]
    %v127 = vld [vmem:[#allocation2 + $0x18] sm:$0xff]
    %v128 = vld [vmem:[#allocation2 + $0x20] sm:$0xff]
    %v129 = vld [vmem:[#allocation2 + $0x28] sm:$0xff]
    %v130 = vld [vmem:[#allocation2 + $0x30] sm:$0xff]
    %v131 = vld [vmem:[#allocation2 + $0x38] sm:$0xff]
    %v132 = vld [vmem:[#allocation2 + $0x40] sm:$0xff]
    %v133 = vld [vmem:[#allocation2 + $0x48] sm:$0xff]
    %v134 = vld [vmem:[#allocation2 + $0x50] sm:$0xff]
    %v135 = vld [vmem:[#allocation2 + $0x58] sm:$0xff]
    %v136 = vld [vmem:[#allocation2 + $0x60] sm:$0xff]
    %v137 = vld [vmem:[#allocation2 + $0x68] sm:$0xff]
    %v138 = vld [vmem:[#allocation2 + $0x70] sm:$0xff]
    %v139 = vld [vmem:[#allocation2 + $0x78] sm:$0xff]
    %v140 = vld [vmem:[#allocation2 + $0x80] sm:$0xff]
    %v141 = vld [vmem:[#allocation2 + $0x88] sm:$0xff]
    %v142 = vld [vmem:[#allocation2 + $0x90] sm:$0xff]
    %v143 = vld [vmem:[#allocation2 + $0x98] sm:$0xff]
    %v144 = vld [vmem:[#allocation2 + $0xa0] sm:$0xff]
    %v145 = vld [vmem:[#allocation2 + $0xa8] sm:$0xff]
    %v146 = vld [vmem:[#allocation2 + $0xb0] sm:$0xff]
    %v147 = vld [vmem:[#allocation2 + $0xb8] sm:$0xff]
    %v148 = vld [vmem:[#allocation2 + $0xc0] sm:$0xff]
    %v149 = vld [vmem:[#allocation2 + $0xc8] sm:$0xff]
    %v150 = vld [vmem:[#allocation2 + $0xd0] sm:$0xff]
    %v151 = vld [vmem:[#allocation2 + $0xd8] sm:$0xff]
    %v152 = vld [vmem:[#allocation2 + $0xe0] sm:$0xff]
    %v153 = vld [vmem:[#allocation2 + $0xe8] sm:$0xff]
    %v154 = vld [vmem:[#allocation2 + $0xf0] sm:$0xff]
    %v155 = vld [vmem:[#allocation2 + $0xf8] sm:$0xff]
    %v156 = vld [vmem:[%s3] sm:$0xff]
    %v158 = vperm.slane %v156, 0
    %v159 = vperm.slane %v156, 1
    %v160 = vperm.slane %v156, 2
    %v161 = vperm.slane %v156, 3
    %v162 = vperm.slane %v156, 4
    %v163 = vperm.slane %v156, 5
    %v164 = vperm.slane %v156, 6
    %v165 = vperm.slane %v156, 7
    %vm174 = vcmask 261120
    %v176 = vsel %vm174, %v122, 0
    %178 = vmatpush.msra.mxu0 0.0
    %179 = vmatpush.msra.mxu0 0.0
    %180 = vmatpush.msra.mxu0 0.0
    %181 = vmatpush.msra.mxu0 0.0
    %182 = vmatpush.msra.mxu0 0.0
    %183 = vmatpush.msra.mxu0 0.0
    %184 = vmatpush.msra.mxu0 0.0
    %185 = vmatpush.msra.mxu0 0.0
    %186 = vmatpush.msra.mxu0 0.0
    %187 = vmatpush.msra.mxu0 0.0
    %188 = vmatpush.msra.mxu0 0.0
    %189 = vmatpush.msra.mxu0 0.0
    %190 = vmatpush.msra.mxu0 %v148
    %191 = vmatpush.msra.mxu0 %v140
    %192 = vmatpush.msra.mxu0 %v132
    %193 = vmatpush.msra.mxu0 %v124
    %194 = vmatmul.f32.gmra.mxu0 %v176
    %v195 = vpop.f32.mrf.mxu0
    %v196 = vadd.f32 %v158, %v195
    %197 = vdwg.mxu0
    %198 = vmatpush.msra.mxu0 0.0
    %199 = vmatpush.msra.mxu0 0.0
    %200 = vmatpush.msra.mxu0 0.0
    %201 = vmatpush.msra.mxu0 0.0
    %202 = vmatpush.msra.mxu0 0.0
    %203 = vmatpush.msra.mxu0 0.0
    %204 = vmatpush.msra.mxu0 0.0
    %205 = vmatpush.msra.mxu0 0.0
    %206 = vmatpush.msra.mxu0 0.0
    %207 = vmatpush.msra.mxu0 0.0
    %208 = vmatpush.msra.mxu0 0.0
    %209 = vmatpush.msra.mxu0 0.0
    %210 = vmatpush.msra.mxu0 %v149
    %211 = vmatpush.msra.mxu0 %v141
    %212 = vmatpush.msra.mxu0 %v133
    %213 = vmatpush.msra.mxu0 %v125
    %214 = vmatmul.f32.gmra.mxu0 %v176
    %v215 = vpop.f32.mrf.mxu0
    %v216 = vadd.f32 %v159, %v215
    %217 = vdwg.mxu0
    %218 = vmatpush.msra.mxu0 0.0
    %219 = vmatpush.msra.mxu0 0.0
    %220 = vmatpush.msra.mxu0 0.0
    %221 = vmatpush.msra.mxu0 0.0
    %222 = vmatpush.msra.mxu0 0.0
    %223 = vmatpush.msra.mxu0 0.0
    %224 = vmatpush.msra.mxu0 0.0
    %225 = vmatpush.msra.mxu0 0.0
    %226 = vmatpush.msra.mxu0 0.0
    %227 = vmatpush.msra.mxu0 0.0
    %228 = vmatpush.msra.mxu0 0.0
    %229 = vmatpush.msra.mxu0 0.0
    %230 = vmatpush.msra.mxu0 %v150
    %231 = vmatpush.msra.mxu0 %v142
    %232 = vmatpush.msra.mxu0 %v134
    %233 = vmatpush.msra.mxu0 %v126
    %234 = vmatmul.f32.gmra.mxu0 %v176
    %v235 = vpop.f32.mrf.mxu0
    %v236 = vadd.f32 %v160, %v235
    %237 = vdwg.mxu0
    %238 = vmatpush.msra.mxu0 0.0
    %239 = vmatpush.msra.mxu0 0.0
    %240 = vmatpush.msra.mxu0 0.0
    %241 = vmatpush.msra.mxu0 0.0
    %242 = vmatpush.msra.mxu0 0.0
    %243 = vmatpush.msra.mxu0 0.0
    %244 = vmatpush.msra.mxu0 0.0
    %245 = vmatpush.msra.mxu0 0.0
    %246 = vmatpush.msra.mxu0 0.0
    %247 = vmatpush.msra.mxu0 0.0
    %248 = vmatpush.msra.mxu0 0.0
    %249 = vmatpush.msra.mxu0 0.0
    %250 = vmatpush.msra.mxu0 %v151
    %251 = vmatpush.msra.mxu0 %v143
    %252 = vmatpush.msra.mxu0 %v135
    %253 = vmatpush.msra.mxu0 %v127
    %254 = vmatmul.f32.gmra.mxu0 %v176
    %v255 = vpop.f32.mrf.mxu0
    %v256 = vadd.f32 %v161, %v255
    %257 = vdwg.mxu0
    %258 = vmatpush.msra.mxu0 0.0
    %259 = vmatpush.msra.mxu0 0.0
    %260 = vmatpush.msra.mxu0 0.0
    %261 = vmatpush.msra.mxu0 0.0
    %262 = vmatpush.msra.mxu0 0.0
    %263 = vmatpush.msra.mxu0 0.0
    %264 = vmatpush.msra.mxu0 0.0
    %265 = vmatpush.msra.mxu0 0.0
    %266 = vmatpush.msra.mxu0 0.0
    %267 = vmatpush.msra.mxu0 0.0
    %268 = vmatpush.msra.mxu0 0.0
    %269 = vmatpush.msra.mxu0 0.0
    %270 = vmatpush.msra.mxu0 %v152
    %271 = vmatpush.msra.mxu0 %v144
    %272 = vmatpush.msra.mxu0 %v136
    %273 = vmatpush.msra.mxu0 %v128
    %274 = vmatmul.f32.gmra.mxu0 %v176
    %v275 = vpop.f32.mrf.mxu0
    %v276 = vadd.f32 %v162, %v275
    %277 = vdwg.mxu0
    %278 = vmatpush.msra.mxu0 0.0
    %279 = vmatpush.msra.mxu0 0.0
    %280 = vmatpush.msra.mxu0 0.0
    %281 = vmatpush.msra.mxu0 0.0
    %282 = vmatpush.msra.mxu0 0.0
    %283 = vmatpush.msra.mxu0 0.0
    %284 = vmatpush.msra.mxu0 0.0
    %285 = vmatpush.msra.mxu0 0.0
    %286 = vmatpush.msra.mxu0 0.0
    %287 = vmatpush.msra.mxu0 0.0
    %288 = vmatpush.msra.mxu0 0.0
    %289 = vmatpush.msra.mxu0 0.0
    %290 = vmatpush.msra.mxu0 %v153
    %291 = vmatpush.msra.mxu0 %v145
    %292 = vmatpush.msra.mxu0 %v137
    %293 = vmatpush.msra.mxu0 %v129
    %294 = vmatmul.f32.gmra.mxu0 %v176
    %v295 = vpop.f32.mrf.mxu0
    %v296 = vadd.f32 %v163, %v295
    %297 = vdwg.mxu0
    %298 = vmatpush.msra.mxu0 0.0
    %299 = vmatpush.msra.mxu0 0.0
    %300 = vmatpush.msra.mxu0 0.0
    %301 = vmatpush.msra.mxu0 0.0
    %302 = vmatpush.msra.mxu0 0.0
    %303 = vmatpush.msra.mxu0 0.0
    %304 = vmatpush.msra.mxu0 0.0
    %305 = vmatpush.msra.mxu0 0.0
    %306 = vmatpush.msra.mxu0 0.0
    %307 = vmatpush.msra.mxu0 0.0
    %308 = vmatpush.msra.mxu0 0.0
    %309 = vmatpush.msra.mxu0 0.0
    %310 = vmatpush.msra.mxu0 %v154
    %311 = vmatpush.msra.mxu0 %v146
    %312 = vmatpush.msra.mxu0 %v138
    %313 = vmatpush.msra.mxu0 %v130
    %314 = vmatmul.f32.gmra.mxu0 %v176
    %v315 = vpop.f32.mrf.mxu0
    %v316 = vadd.f32 %v164, %v315
    %317 = vdwg.mxu0
    %318 = vmatpush.msra.mxu0 0.0
    %319 = vmatpush.msra.mxu0 0.0
    %320 = vmatpush.msra.mxu0 0.0
    %321 = vmatpush.msra.mxu0 0.0
    %322 = vmatpush.msra.mxu0 0.0
    %323 = vmatpush.msra.mxu0 0.0
    %324 = vmatpush.msra.mxu0 0.0
    %325 = vmatpush.msra.mxu0 0.0
    %326 = vmatpush.msra.mxu0 0.0
    %327 = vmatpush.msra.mxu0 0.0
    %328 = vmatpush.msra.mxu0 0.0
    %329 = vmatpush.msra.mxu0 0.0
    %330 = vmatpush.msra.mxu0 %v155
    %331 = vmatpush.msra.mxu0 %v147
    %332 = vmatpush.msra.mxu0 %v139
    %333 = vmatpush.msra.mxu0 %v131
    %334 = vmatmul.f32.gmra.mxu0 %v176
    %v335 = vpop.f32.mrf.mxu0
    %v336 = vadd.f32 %v165, %v335
    %337 = vdwg.mxu0
    %v338 = vtanh.pop %v196
    %v339 = vtanh.pop %v216
    %v340 = vtanh.pop %v236
    %v341 = vtanh.pop %v256
    %v342 = vtanh.pop %v276
    %v343 = vtanh.pop %v296
    %v344 = vtanh.pop %v316
    %v345 = vtanh.pop %v336
    %v354 = vrot.slane %v339, 6
    %v355 = vrot.slane %v340, 4
    %v356 = vrot.slane %v341, 2
    %v357 = vrot.slane %v343, 6
    %v358 = vrot.slane %v344, 4
    %v359 = vrot.slane %v345, 2
    %v360 = vsel %vm100, %v338, %v354
    %vm361 = vcmask 1045508
    %v362 = vsel %vm361, %v355, %v356
    %vm363 = vcmask 1043456
    %v364 = vsel %vm363, %v360, %v362
    %v365 = vsel %vm100, %v342, %v357
    %v366 = vsel %vm361, %v358, %v359
    %v367 = vsel %vm363, %v365, %v366
    %370 = vst [vmem:[#allocation5] sm:$0xff] %v364
    %371 = vst [vmem:[#allocation5 + $0x8] sm:$0xff] %v367
    // Predicated region
    $region22: #{answer_encoder_forward.1} parent=1 // pred_check
      _
    $region23: #{answer_encoder_forward.1} parent=1 // pred_check_branch
      %373 = sbr.rel (0) target = $region25
    $region24: #{answer_encoder_forward.1} parent=1 // pred_region
      %375 = vsyncadd [#allocation4], 0
      %s377 = sshll.u32 [#allocation5], 4
      %s378 = int_to_ptr.vmem [resolvable:$true] %s377
      %s379 = sshll.u32 %s4, 4
      %s380 = int_to_ptr.hbm [resolvable:$true] %s379
      %382 = dma.vmem_to_hbm [thread:$0]  %s378, 256, %s380, [#allocation4]
    $region25: #{answer_encoder_forward.1} parent=1 // pred_fallthru
      _
    // Predicated region
    $region26: #{answer_encoder_forward.1} parent=1 // pred_check
      _
    $region27: #{answer_encoder_forward.1} parent=1 // pred_check_branch
      %384 = sbr.rel (0) target = $region29
    $region28: #{answer_encoder_forward.1} parent=1 // pred_region
      %386 = dma.done [#allocation4], 256
    $region29: #{answer_encoder_forward.1} parent=1 // pred_fallthru
      _
    %387 = vsyncpa [#allocation3], 1
    %388 = vsyncpa [#allocation4], 1

</llo_original>
